<compile_context>
chip_gen: v7x
topology: tpu7x:2x2x1
jax: 0.10.0
libtpu: 0.0.40
codegen_flags: <defaults>
</compile_context>

<pallas_src>
import jax
import jax.numpy as jnp
from jax import lax
from jax.experimental import pallas as pl
from jax.experimental.pallas import tpu as pltpu


def _round_up(x, m):
    return ((x + m - 1) // m) * m


def mlp_kernel(x_ref, w1_ref, b1_ref, w2_ref, b2_ref, w3_ref, b3_ref, o_ref):
    x = x_ref[...]                                            # (TB, 5) f32, batch-major

    # input_layer + ReLU: contract the 5-feature axis of x against w1's in-axis,
    # producing batch-on-lanes activations (10, TB); f32 accumulation throughout.
    h1 = lax.dot_general(w1_ref[...], x, (((1,), (1,)), ((), ())),
                         preferred_element_type=jnp.float32) + b1_ref[...]
    h1 = jnp.maximum(h1, 0.0)                                 # stays f32 (VMEM-only)

    # hidden_layer + ReLU: (10, TB)
    h2 = jnp.dot(w2_ref[...], h1, preferred_element_type=jnp.float32) + b2_ref[...]
    h2 = jnp.maximum(h2, 0.0)

    # output_layer: (2, TB)
    logits = jnp.dot(w3_ref[...], h2, preferred_element_type=jnp.float32) + b3_ref[...]

    # 2-class softmax over the class axis (== dim=1 of the original (B, 2) layout):
    # softmax([l0, l1])[0] == 1 / (1 + exp(l1 - l0)); p1 = 1 - p0 (exactly normalized).
    d = logits[1:2, :] - logits[0:1, :]                       # (1, TB)
    p0 = 1.0 / (1.0 + jnp.exp(d))
    o_ref[0:1, :] = p0.astype(o_ref.dtype)
    o_ref[1:2, :] = (1.0 - p0).astype(o_ref.dtype)


def basic_nn_forward(x, params, *, tile_b=16 * 1024, out_dtype=jnp.float32,
                     transposed_output=False):
    """x: (B, 5) f32; params: (w1, b1, w2, b2, w3, b3), weights (out, in), biases (out,).

    Returns softmax probabilities: (B, 2) by default (PyTorch parity), or the
    lane-dense (2, B) kernel output when transposed_output=True."""
    w1, b1, w2, b2, w3, b3 = params
    B = x.shape[0]
    assert x.shape[1] == 5

    # Batch tile: lane-aligned (multiple of 128), large enough that per-grid-step
    # fixed overhead is amortized, and preferring >= 2 grid steps (both v7x TCs).
    if B < 128:
        tile = B                                        # single full-extent block
    else:
        tile = min(_round_up(max(tile_b, 128), 128),
                   32 * 1024,
                   _round_up(pl.cdiv(B, 2), 128))
    grid = pl.cdiv(B, tile)

    # VMEM budget: (TB, 5) input blocks lane-pad to 128 in VMEM, double-buffered;
    # (2, TB) output blocks sublane-pad to 8. Raise the scoped-VMEM limit so large
    # tiles compile on every generation, capped well under v7x's 64 MiB physical.
    in_bytes = jnp.dtype(x.dtype).itemsize
    out_bytes = jnp.dtype(out_dtype).itemsize
    vmem_needed = 2 * tile * 128 * in_bytes + 2 * 8 * tile * out_bytes + (2 << 20)
    vmem_limit = int(max(32 << 20, min(3 * vmem_needed // 2, 64 << 20)))

    resident = lambda i: (0, 0)      # weights/biases stay in VMEM across all steps

    out = pl.pallas_call(
        mlp_kernel,
        out_shape=jax.ShapeDtypeStruct((2, B), out_dtype),
        grid=(grid,),
        in_specs=[
            pl.BlockSpec((tile, 5), lambda i: (i, 0)),   # x tile (streamed)
            pl.BlockSpec((10, 5), resident),             # w1
            pl.BlockSpec((10, 1), resident),             # b1
            pl.BlockSpec((10, 10), resident),            # w2
            pl.BlockSpec((10, 1), resident),             # b2
            pl.BlockSpec((2, 10), resident),             # w3
            pl.BlockSpec((2, 1), resident),              # b3
        ],
        out_specs=pl.BlockSpec((2, tile), lambda i: (0, i)),
        compiler_params=pltpu.CompilerParams(
            dimension_semantics=("parallel",),           # megacore on v7x
            vmem_limit_bytes=vmem_limit),
    )(x, w1, b1.reshape(-1, 1), w2, b2.reshape(-1, 1), w3, b3.reshape(-1, 1))

    if transposed_output:
        return out                                       # (2, B), no extra HBM pass
    return out.T                                         # (B, 2), PyTorch parity


def basic_nn_reference(x, params):
    """Pure-JAX f32 reference matching the PyTorch forward."""
    w1, b1, w2, b2, w3, b3 = params
    h1 = jnp.maximum(x @ w1.T + b1.reshape(1, -1), 0.0)
    h2 = jnp.maximum(h1 @ w2.T + b2.reshape(1, -1), 0.0)
    logits = h2 @ w3.T + b3.reshape(1, -1)
    return jax.nn.softmax(logits, axis=1)


def init_params(key):
    """Deterministic init with PyTorch layer shapes: weights (out, in), biases (out,).
    # TODO(synk): PyTorch's default Kaiming-uniform init not replicated; copy real
    # weights in for exact parity with a trained/default-initialized BasicNN."""
    k = jax.random.split(key, 6)
    w1 = jax.random.normal(k[0], (10, 5), jnp.float32) * 0.3
    b1 = jax.random.normal(k[1], (10,), jnp.float32) * 0.1
    w2 = jax.random.normal(k[2], (10, 10), jnp.float32) * 0.3
    b2 = jax.random.normal(k[3], (10,), jnp.float32) * 0.1
    w3 = jax.random.normal(k[4], (2, 10), jnp.float32) * 0.3
    b3 = jax.random.normal(k[5], (2,), jnp.float32) * 0.1
    return (w1, b1, w2, b2, w3, b3)


if __name__ == "__main__":
    key = jax.random.PRNGKey(0)
    pkey, xk1, xk2 = jax.random.split(key, 3)
    params = init_params(pkey)

    # --- small batch: single full-extent block, (B, 2) output (PyTorch layout) ---
    x_small = jax.random.normal(xk1, (16, 5), jnp.float32)
    out_small = jax.block_until_ready(basic_nn_forward(x_small, params))
    ref_small = basic_nn_reference(x_small, params)
    assert out_small.shape == (16, 2)
    assert jnp.allclose(jnp.sum(out_small, axis=1), 1.0, atol=1e-6)
    assert jnp.allclose(out_small, ref_small, atol=1e-5)

    # --- ragged multi-tile path: B=200 -> tile=128, grid=2, masked edge block; ---
    # --- lane-dense (2, B) output returned directly (no wrapper transpose)      ---
    x_big = jax.random.normal(xk2, (200, 5), jnp.float32)
    out_big = jax.block_until_ready(
        basic_nn_forward(x_big, params, transposed_output=True))
    ref_big = basic_nn_reference(x_big, params)
    assert out_big.shape == (2, 200)
    assert jnp.allclose(jnp.sum(out_big, axis=0), 1.0, atol=1e-6)
    assert jnp.allclose(out_big.T, ref_big, atol=1e-5)

    print("KERNEL_OK")
</pallas_src>

<mosaic_0001>
module attributes {stable_mosaic.version = 11 : i64} {
  func.func @mlp_kernel(%arg0: i32, %arg1: memref<16x5xf32, #tpu.memory_space<vmem>>, %arg2: memref<10x5xf32, #tpu.memory_space<vmem>>, %arg3: memref<10x1xf32, #tpu.memory_space<vmem>>, %arg4: memref<10x10xf32, #tpu.memory_space<vmem>>, %arg5: memref<10x1xf32, #tpu.memory_space<vmem>>, %arg6: memref<2x10xf32, #tpu.memory_space<vmem>>, %arg7: memref<2x1xf32, #tpu.memory_space<vmem>>, %arg8: memref<2x16xf32, #tpu.memory_space<vmem>>) attributes {dimension_semantics = [#tpu.dimension_semantics<parallel>], iteration_bounds = array<i64: 1>, scalar_prefetch = 0 : i64, scratch_operands = 0 : i64, tpu.core_type = #tpu.core_type<tc>, window_params = [{transform_indices = @transform_0, window_bounds = array<i64: 16, 5>}, {pipeline_mode = #tpu.pipeline_mode<synchronous>, transform_indices = @transform_1, window_bounds = array<i64: 10, 5>}, {pipeline_mode = #tpu.pipeline_mode<synchronous>, transform_indices = @transform_2, window_bounds = array<i64: 10, 1>}, {pipeline_mode = #tpu.pipeline_mode<synchronous>, transform_indices = @transform_3, window_bounds = array<i64: 10, 10>}, {pipeline_mode = #tpu.pipeline_mode<synchronous>, transform_indices = @transform_4, window_bounds = array<i64: 10, 1>}, {pipeline_mode = #tpu.pipeline_mode<synchronous>, transform_indices = @transform_5, window_bounds = array<i64: 2, 10>}, {pipeline_mode = #tpu.pipeline_mode<synchronous>, transform_indices = @transform_6, window_bounds = array<i64: 2, 1>}, {transform_indices = @transform_7, window_bounds = array<i64: 2, 16>}]} {
    %c0 = arith.constant 0 : index
    %c0_0 = arith.constant 0 : index
    %0 = vector.load %arg1[%c0, %c0_0] : memref<16x5xf32, #tpu.memory_space<vmem>>, vector<16x5xf32>
    %c0_1 = arith.constant 0 : index
    %c0_2 = arith.constant 0 : index
    %1 = vector.load %arg2[%c0_1, %c0_2] : memref<10x5xf32, #tpu.memory_space<vmem>>, vector<10x5xf32>
    %cst = arith.constant dense<0.000000e+00> : vector<10x16xf32>
    %2 = tpu.matmul %1, %0, %cst {dimension_numbers = #tpu.dot_dimension_numbers<[1], [1], [0], [0], [0, 0, 1, 0], [], []>} : vector<10x5xf32>, vector<16x5xf32>, vector<10x16xf32> -> vector<10x16xf32>
    %c0_3 = arith.constant 0 : index
    %c0_4 = arith.constant 0 : index
    %3 = vector.load %arg3[%c0_3, %c0_4] : memref<10x1xf32, #tpu.memory_space<vmem>>, vector<10x1xf32>
    %4 = vector.broadcast %3 : vector<10x1xf32> to vector<10x16xf32>
    %5 = arith.addf %2, %4 : vector<10x16xf32>
    %cst_5 = arith.constant 0.000000e+00 : f32
    %6 = vector.broadcast %cst_5 : f32 to vector<10x16xf32>
    %7 = arith.maximumf %5, %6 : vector<10x16xf32>
    %c0_6 = arith.constant 0 : index
    %c0_7 = arith.constant 0 : index
    %8 = vector.load %arg4[%c0_6, %c0_7] : memref<10x10xf32, #tpu.memory_space<vmem>>, vector<10x10xf32>
    %cst_8 = arith.constant dense<0.000000e+00> : vector<10x16xf32>
    %9 = tpu.matmul %8, %7, %cst_8 {dimension_numbers = #tpu.dot_dimension_numbers<[1], [0], [0], [1], [0, 0, 1, 1], [], []>} : vector<10x10xf32>, vector<10x16xf32>, vector<10x16xf32> -> vector<10x16xf32>
    %c0_9 = arith.constant 0 : index
    %c0_10 = arith.constant 0 : index
    %10 = vector.load %arg5[%c0_9, %c0_10] : memref<10x1xf32, #tpu.memory_space<vmem>>, vector<10x1xf32>
    %11 = vector.broadcast %10 : vector<10x1xf32> to vector<10x16xf32>
    %12 = arith.addf %9, %11 : vector<10x16xf32>
    %cst_11 = arith.constant 0.000000e+00 : f32
    %13 = vector.broadcast %cst_11 : f32 to vector<10x16xf32>
    %14 = arith.maximumf %12, %13 : vector<10x16xf32>
    %c0_12 = arith.constant 0 : index
    %c0_13 = arith.constant 0 : index
    %15 = vector.load %arg6[%c0_12, %c0_13] : memref<2x10xf32, #tpu.memory_space<vmem>>, vector<2x10xf32>
    %cst_14 = arith.constant dense<0.000000e+00> : vector<2x16xf32>
    %16 = tpu.matmul %15, %14, %cst_14 {dimension_numbers = #tpu.dot_dimension_numbers<[1], [0], [0], [1], [0, 0, 1, 1], [], []>} : vector<2x10xf32>, vector<10x16xf32>, vector<2x16xf32> -> vector<2x16xf32>
    %c0_15 = arith.constant 0 : index
    %c0_16 = arith.constant 0 : index
    %17 = vector.load %arg7[%c0_15, %c0_16] : memref<2x1xf32, #tpu.memory_space<vmem>>, vector<2x1xf32>
    %18 = vector.broadcast %17 : vector<2x1xf32> to vector<2x16xf32>
    %19 = arith.addf %16, %18 : vector<2x16xf32>
    %20 = vector.extract_strided_slice %19 {offsets = [1, 0], sizes = [1, 16], strides = [1, 1]} : vector<2x16xf32> to vector<1x16xf32>
    %21 = vector.extract_strided_slice %19 {offsets = [0, 0], sizes = [1, 16], strides = [1, 1]} : vector<2x16xf32> to vector<1x16xf32>
    %22 = arith.subf %20, %21 : vector<1x16xf32>
    %23 = math.exp %22 : vector<1x16xf32>
    %cst_17 = arith.constant 1.000000e+00 : f32
    %24 = vector.broadcast %cst_17 : f32 to vector<1x16xf32>
    %25 = arith.addf %24, %23 : vector<1x16xf32>
    %cst_18 = arith.constant 1.000000e+00 : f32
    %26 = vector.broadcast %cst_18 : f32 to vector<1x16xf32>
    %27 = arith.divf %26, %25 : vector<1x16xf32>
    %c0_19 = arith.constant 0 : index
    %c0_20 = arith.constant 0 : index
    %28 = vector.load %arg8[%c0_19, %c0_20] : memref<2x16xf32, #tpu.memory_space<vmem>>, vector<1x16xf32>
    tpu.vector_store %arg8[%c0_19, %c0_20], %27 {strides = array<i32>} : memref<2x16xf32, #tpu.memory_space<vmem>>, vector<1x16xf32>,
    %cst_21 = arith.constant 1.000000e+00 : f32
    %29 = vector.broadcast %cst_21 : f32 to vector<1x16xf32>
    %30 = arith.subf %29, %27 : vector<1x16xf32>
    %c1 = arith.constant 1 : index
    %c0_22 = arith.constant 0 : index
    %31 = vector.load %arg8[%c1, %c0_22] : memref<2x16xf32, #tpu.memory_space<vmem>>, vector<1x16xf32>
    tpu.vector_store %arg8[%c1, %c0_22], %30 {strides = array<i32>} : memref<2x16xf32, #tpu.memory_space<vmem>>, vector<1x16xf32>,
    return
  }
  func.func @transform_0(%arg0: i32) -> (i32, i32) {
    %c0_i32 = arith.constant 0 : i32
    %c0_i32_0 = arith.constant 0 : i32
    return %arg0, %c0_i32 : i32, i32
  }
  func.func @transform_1(%arg0: i32) -> (i32, i32) {
    %c0_i32 = arith.constant 0 : i32
    %c0_i32_0 = arith.constant 0 : i32
    %c0_i32_1 = arith.constant 0 : i32
    return %c0_i32, %c0_i32_0 : i32, i32
  }
  func.func @transform_2(%arg0: i32) -> (i32, i32) {
    %c0_i32 = arith.constant 0 : i32
    %c0_i32_0 = arith.constant 0 : i32
    %c0_i32_1 = arith.constant 0 : i32
    return %c0_i32, %c0_i32_0 : i32, i32
  }
  func.func @transform_3(%arg0: i32) -> (i32, i32) {
    %c0_i32 = arith.constant 0 : i32
    %c0_i32_0 = arith.constant 0 : i32
    %c0_i32_1 = arith.constant 0 : i32
    return %c0_i32, %c0_i32_0 : i32, i32
  }
  func.func @transform_4(%arg0: i32) -> (i32, i32) {
    %c0_i32 = arith.constant 0 : i32
    %c0_i32_0 = arith.constant 0 : i32
    %c0_i32_1 = arith.constant 0 : i32
    return %c0_i32, %c0_i32_0 : i32, i32
  }
  func.func @transform_5(%arg0: i32) -> (i32, i32) {
    %c0_i32 = arith.constant 0 : i32
    %c0_i32_0 = arith.constant 0 : i32
    %c0_i32_1 = arith.constant 0 : i32
    return %c0_i32, %c0_i32_0 : i32, i32
  }
  func.func @transform_6(%arg0: i32) -> (i32, i32) {
    %c0_i32 = arith.constant 0 : i32
    %c0_i32_0 = arith.constant 0 : i32
    %c0_i32_1 = arith.constant 0 : i32
    return %c0_i32, %c0_i32_0 : i32, i32
  }
  func.func @transform_7(%arg0: i32) -> (i32, i32) {
    %c0_i32 = arith.constant 0 : i32
    %c0_i32_0 = arith.constant 0 : i32
    return %c0_i32, %arg0 : i32, i32
  }
}

</mosaic_0001>

<llo_original>
// kernel: tpu_custom_call.1
$region0: #{tpu_custom_call.1}
  #allocation0 [shape = 'u32[]', space=smem, size = 0x4, offset = 0x4, fixed_abs, tag = 'smem constant byte address 0x4 - core index']
  #allocation1 [shape = 'u32[144,128]{1,0:T(1,128)}', space=vmem, size = 0x12000, scoped, tag = 'internal scratch']
  %s0 = inlined_call_operand.vmem [shape: f32[16,5], index: 0, kind: input, shape index: {}]
  %s1 = inlined_call_operand.vmem [shape: f32[10,5], index: 1, kind: input, shape index: {}]
  %s2 = inlined_call_operand.vmem [shape: f32[10,1], index: 2, kind: input, shape index: {}]
  %s3 = inlined_call_operand.vmem [shape: f32[10,10], index: 3, kind: input, shape index: {}]
  %s4 = inlined_call_operand.vmem [shape: f32[10,1], index: 4, kind: input, shape index: {}]
  %s5 = inlined_call_operand.vmem [shape: f32[2,10], index: 5, kind: input, shape index: {}]
  %s6 = inlined_call_operand.vmem [shape: f32[2,1], index: 6, kind: input, shape index: {}]
  %s7 = inlined_call_operand.hbm [shape: f32[2,16], index: 7, kind: output, shape index: {}]
  %s8 = sld [smem:[#allocation0]]
  $region38: #{tpu_custom_call.1} parent=0
    _
  %s10 = ssub.s32 1, %s8
  %s11 = scalar_select 0, %s10, %s8
  $region1: #{tpu_custom_call.1} parent=0
    #allocation2 [shape = 'u8[1024]{0}', space=vmem, size = 0x400, scoped, tag = 'output window, operand 0, single buffered']
    #allocation3 [shape = 's32[1]{0}', space=sflag, size = 0x4, scoped, tag = 'scoped memory for tpu_custom_call.1']
    %12 = vsyncpa [#allocation3], 0
    // Predicated region
    $region2: #{tpu_custom_call.1} parent=1 // pred_check
      _
    $region3: #{tpu_custom_call.1} parent=1 // pred_check_branch
      %14 = sbr.rel (0) target = $region5
    $region4: #{tpu_custom_call.1} parent=1 // pred_region
      _
    $region5: #{tpu_custom_call.1} parent=1 // pred_fallthru
      _
    // Predicated region
    $region6: #{tpu_custom_call.1} parent=1 // pred_check
      _
    $region7: #{tpu_custom_call.1} parent=1 // pred_check_branch
      %16 = sbr.rel (0) target = $region9
    $region8: #{tpu_custom_call.1} parent=1 // pred_region
      _
    $region9: #{tpu_custom_call.1} parent=1 // pred_fallthru
      _
    // Predicated region
    $region10: #{tpu_custom_call.1} parent=1 // pred_check
      _
    $region11: #{tpu_custom_call.1} parent=1 // pred_check_branch
      %18 = sbr.rel (0) target = $region13
    $region12: #{tpu_custom_call.1} parent=1 // pred_region
      _
    $region13: #{tpu_custom_call.1} parent=1 // pred_fallthru
      _
    // Predicated region
    $region14: #{tpu_custom_call.1} parent=1 // pred_check
      _
    $region15: #{tpu_custom_call.1} parent=1 // pred_check_branch
      %20 = sbr.rel (0) target = $region17
    $region16: #{tpu_custom_call.1} parent=1 // pred_region
      _
    $region17: #{tpu_custom_call.1} parent=1 // pred_fallthru
      _
    // Predicated region
    $region18: #{tpu_custom_call.1} parent=1 // pred_check
      _
    $region19: #{tpu_custom_call.1} parent=1 // pred_check_branch
      %22 = sbr.rel (0) target = $region21
    $region20: #{tpu_custom_call.1} parent=1 // pred_region
      _
    $region21: #{tpu_custom_call.1} parent=1 // pred_fallthru
      _
    // Predicated region
    $region22: #{tpu_custom_call.1} parent=1 // pred_check
      _
    $region23: #{tpu_custom_call.1} parent=1 // pred_check_branch
      %24 = sbr.rel (0) target = $region25
    $region24: #{tpu_custom_call.1} parent=1 // pred_region
      _
    $region25: #{tpu_custom_call.1} parent=1 // pred_fallthru
      _
    // Predicated region
    $region26: #{tpu_custom_call.1} parent=1 // pred_check
      _
    $region27: #{tpu_custom_call.1} parent=1 // pred_check_branch
      %26 = sbr.rel (0) target = $region29
    $region28: #{tpu_custom_call.1} parent=1 // pred_region
      _
    $region29: #{tpu_custom_call.1} parent=1 // pred_fallthru
      _
    %v27 = vld [vmem:[%s0] sm:$0xff]
    %v28 = vld [vmem:[%s0 + $0x8] sm:$0xff]
    %v29 = vld [vmem:[%s1] sm:$0xff]
    %v30 = vld [vmem:[%s1 + $0x8] sm:$0x3]
    %v31 = vld [vmem:[%s2] sm:$0xff]
    %v32 = vld [vmem:[%s2 + $0x8] sm:$0x3]
    %34 = vset.pattern.permute.xlu0 0
    %35 = vperm.xlu0 %34, %v31
    %v36 = vpop.permute.xlu0 %35
    %39 = vset.pattern.permute.xlu0 0
    %40 = vperm.xlu0 %39, %v32
    %v41 = vpop.permute.xlu0 %40
    %vm43 = vcmask 39936
    %v45 = vsel %vm43, %v29, 0
    %v48 = vsel %vm43, %v30, 0
    %v51 = vsel %vm43, %v27, 0
    %v54 = vsel %vm43, %v28, 0
    %56 = vmatprep.subr.mxu0 0.0
    %57 = vmatpush1.xpose.msra.mxu0 %v51
    %58 = vmatprep.subr.mxu0 0.0
    %59 = vmatpush1.xpose.msra.mxu0 %v54
    %60 = vmatprep.subr.mxu0 0.0
    %61 = vmatpush1.xpose.msra.mxu0 0.0
    %62 = vmatprep.subr.mxu0 0.0
    %63 = vmatpush1.xpose.msra.mxu0 0.0
    %64 = vmatprep.subr.mxu0 0.0
    %65 = vmatpush1.xpose.msra.mxu0 0.0
    %66 = vmatprep.subr.mxu0 0.0
    %67 = vmatpush1.xpose.msra.mxu0 0.0
    %68 = vmatprep.subr.mxu0 0.0
    %69 = vmatpush1.xpose.msra.mxu0 0.0
    %70 = vmatprep.subr.mxu0 0.0
    %71 = vmatpush1.xpose.msra.mxu0 0.0
    %72 = vmatprep.subr.mxu0 0.0
    %73 = vmatpush1.xpose.msra.mxu0 0.0
    %74 = vmatprep.subr.mxu0 0.0
    %75 = vmatpush1.xpose.msra.mxu0 0.0
    %76 = vmatprep.subr.mxu0 0.0
    %77 = vmatpush1.xpose.msra.mxu0 0.0
    %78 = vmatprep.subr.mxu0 0.0
    %79 = vmatpush1.xpose.msra.mxu0 0.0
    %80 = vmatprep.subr.mxu0 0.0
    %81 = vmatpush1.xpose.msra.mxu0 0.0
    %82 = vmatprep.subr.mxu0 0.0
    %83 = vmatpush1.xpose.msra.mxu0 0.0
    %84 = vmatprep.subr.mxu0 0.0
    %85 = vmatpush1.xpose.msra.mxu0 0.0
    %86 = vmatprep.subr.mxu0 0.0
    %87 = vmatpush1.xpose.msra.mxu0 0.0
    %88 = vmatprep.subr.mxu0 0.0
    %89 = vmatpush1.xpose.msra.mxu0 0.0
    %90 = vmatprep.subr.mxu0 0.0
    %91 = vmatpush1.xpose.msra.mxu0 0.0
    %92 = vmatprep.subr.mxu0 0.0
    %93 = vmatpush1.xpose.msra.mxu0 0.0
    %94 = vmatprep.subr.mxu0 0.0
    %95 = vmatpush1.xpose.msra.mxu0 0.0
    %96 = vmatprep.subr.mxu0 0.0
    %97 = vmatpush1.xpose.msra.mxu0 0.0
    %98 = vmatprep.subr.mxu0 0.0
    %99 = vmatpush1.xpose.msra.mxu0 0.0
    %100 = vmatprep.subr.mxu0 0.0
    %101 = vmatpush1.xpose.msra.mxu0 0.0
    %102 = vmatprep.subr.mxu0 0.0
    %103 = vmatpush1.xpose.msra.mxu0 0.0
    %104 = vmatprep.subr.mxu0 0.0
    %105 = vmatpush1.xpose.msra.mxu0 0.0
    %106 = vmatprep.subr.mxu0 0.0
    %107 = vmatpush1.xpose.msra.mxu0 0.0
    %108 = vmatprep.subr.mxu0 0.0
    %109 = vmatpush1.xpose.msra.mxu0 0.0
    %110 = vmatprep.subr.mxu0 0.0
    %111 = vmatpush1.xpose.msra.mxu0 0.0
    %112 = vmatprep.subr.mxu0 0.0
    %113 = vmatpush1.xpose.msra.mxu0 0.0
    %114 = vmatprep.subr.mxu0 0.0
    %115 = vmatpush1.xpose.msra.mxu0 0.0
    %116 = vmatprep.subr.mxu0 0.0
    %117 = vmatpush1.xpose.msra.mxu0 0.0
    %118 = vmatprep.subr.mxu0 0.0
    %119 = vmatpush1.xpose.msra.mxu0 0.0
    %120 = vmatprep.mubr.f32.mxu0 0.0
    %121 = vmatmul.mubr.f32.gmra.mrb[0].mxu0 %v45
    %v122 = vpop.f32.mrb[0].mxu0
    %v123 = vadd.f32 %v36, %v122
    %v124 = vpop.f32.mrb[0].mxu0
    %125 = vmatprep.mubr.f32.mxu0 0.0
    %126 = vmatmul.mubr.f32.gmra.mrb[0].mxu0 %v48
    %v127 = vpop.f32.mrb[0].mxu0
    %v128 = vadd.f32 %v41, %v127
    %v129 = vpop.f32.mrb[0].mxu0
    %130 = vdwg.mxu0
    %v131 = vmax.f32 %v123, 0.0
    %v132 = vmax.f32 %v128, 0.0
    %v133 = vld [vmem:[%s3] sm:$0xff]
    %v134 = vld [vmem:[%s3 + $0x8] sm:$0x3]
    %v135 = vld [vmem:[%s4] sm:$0xff]
    %v136 = vld [vmem:[%s4 + $0x8] sm:$0x3]
    %138 = vset.pattern.permute.xlu0 0
    %139 = vperm.xlu0 %138, %v135
    %v140 = vpop.permute.xlu0 %139
    %143 = vset.pattern.permute.xlu0 0
    %144 = vperm.xlu0 %143, %v136
    %v145 = vpop.permute.xlu0 %144
    %vm147 = vcmask 80896
    %v149 = vsel %vm147, %v133, 0
    %v152 = vsel %vm147, %v134, 0
    %vm154 = vcmask 1041408
    %v156 = vsel %vm154, %v132, 0
    %158 = vmatprep.subr.mxu0 0.0
    %159 = vmatpush1.msra.mxu0 %v131
    %160 = vmatprep.subr.mxu0 0.0
    %161 = vmatpush1.msra.mxu0 %v156
    %162 = vmatprep.subr.mxu0 0.0
    %163 = vmatpush1.msra.mxu0 0.0
    %164 = vmatprep.subr.mxu0 0.0
    %165 = vmatpush1.msra.mxu0 0.0
    %166 = vmatprep.subr.mxu0 0.0
    %167 = vmatpush1.msra.mxu0 0.0
    %168 = vmatprep.subr.mxu0 0.0
    %169 = vmatpush1.msra.mxu0 0.0
    %170 = vmatprep.subr.mxu0 0.0
    %171 = vmatpush1.msra.mxu0 0.0
    %172 = vmatprep.subr.mxu0 0.0
    %173 = vmatpush1.msra.mxu0 0.0
    %174 = vmatprep.subr.mxu0 0.0
    %175 = vmatpush1.msra.mxu0 0.0
    %176 = vmatprep.subr.mxu0 0.0
    %177 = vmatpush1.msra.mxu0 0.0
    %178 = vmatprep.subr.mxu0 0.0
    %179 = vmatpush1.msra.mxu0 0.0
    %180 = vmatprep.subr.mxu0 0.0
    %181 = vmatpush1.msra.mxu0 0.0
    %182 = vmatprep.subr.mxu0 0.0
    %183 = vmatpush1.msra.mxu0 0.0
    %184 = vmatprep.subr.mxu0 0.0
    %185 = vmatpush1.msra.mxu0 0.0
    %186 = vmatprep.subr.mxu0 0.0
    %187 = vmatpush1.msra.mxu0 0.0
    %188 = vmatprep.subr.mxu0 0.0
    %189 = vmatpush1.msra.mxu0 0.0
    %190 = vmatprep.subr.mxu0 0.0
    %191 = vmatpush1.msra.mxu0 0.0
    %192 = vmatprep.subr.mxu0 0.0
    %193 = vmatpush1.msra.mxu0 0.0
    %194 = vmatprep.subr.mxu0 0.0
    %195 = vmatpush1.msra.mxu0 0.0
    %196 = vmatprep.subr.mxu0 0.0
    %197 = vmatpush1.msra.mxu0 0.0
    %198 = vmatprep.subr.mxu0 0.0
    %199 = vmatpush1.msra.mxu0 0.0
    %200 = vmatprep.subr.mxu0 0.0
    %201 = vmatpush1.msra.mxu0 0.0
    %202 = vmatprep.subr.mxu0 0.0
    %203 = vmatpush1.msra.mxu0 0.0
    %204 = vmatprep.subr.mxu0 0.0
    %205 = vmatpush1.msra.mxu0 0.0
    %206 = vmatprep.subr.mxu0 0.0
    %207 = vmatpush1.msra.mxu0 0.0
    %208 = vmatprep.subr.mxu0 0.0
    %209 = vmatpush1.msra.mxu0 0.0
    %210 = vmatprep.subr.mxu0 0.0
    %211 = vmatpush1.msra.mxu0 0.0
    %212 = vmatprep.subr.mxu0 0.0
    %213 = vmatpush1.msra.mxu0 0.0
    %214 = vmatprep.subr.mxu0 0.0
    %215 = vmatpush1.msra.mxu0 0.0
    %216 = vmatprep.subr.mxu0 0.0
    %217 = vmatpush1.msra.mxu0 0.0
    %218 = vmatprep.subr.mxu0 0.0
    %219 = vmatpush1.msra.mxu0 0.0
    %220 = vmatprep.subr.mxu0 0.0
    %221 = vmatpush1.msra.mxu0 0.0
    %222 = vmatprep.mubr.f32.mxu0 0.0
    %223 = vmatmul.mubr.f32.gmra.mrb[0].mxu0 %v149
    %v224 = vpop.f32.mrb[0].mxu0
    %v225 = vadd.f32 %v140, %v224
    %v226 = vpop.f32.mrb[0].mxu0
    %227 = vmatprep.mubr.f32.mxu0 0.0
    %228 = vmatmul.mubr.f32.gmra.mrb[0].mxu0 %v152
    %v229 = vpop.f32.mrb[0].mxu0
    %v230 = vadd.f32 %v145, %v229
    %v231 = vpop.f32.mrb[0].mxu0
    %232 = vdwg.mxu0
    %v233 = vmax.f32 %v225, 0.0
    %v234 = vmax.f32 %v230, 0.0
    %v235 = vld [vmem:[%s5] sm:$0x3]
    %v236 = vld [vmem:[%s6] sm:$0x3]
    %238 = vset.pattern.permute.xlu0 0
    %239 = vperm.xlu0 %238, %v236
    %v240 = vpop.permute.xlu0 %239
    %v243 = vsel %vm147, %v235, 0
    %v246 = vsel %vm154, %v234, 0
    %248 = vmatprep.subr.mxu0 0.0
    %249 = vmatpush1.msra.mxu0 %v233
    %250 = vmatprep.subr.mxu0 0.0
    %251 = vmatpush1.msra.mxu0 %v246
    %252 = vmatprep.subr.mxu0 0.0
    %253 = vmatpush1.msra.mxu0 0.0
    %254 = vmatprep.subr.mxu0 0.0
    %255 = vmatpush1.msra.mxu0 0.0
    %256 = vmatprep.subr.mxu0 0.0
    %257 = vmatpush1.msra.mxu0 0.0
    %258 = vmatprep.subr.mxu0 0.0
    %259 = vmatpush1.msra.mxu0 0.0
    %260 = vmatprep.subr.mxu0 0.0
    %261 = vmatpush1.msra.mxu0 0.0
    %262 = vmatprep.subr.mxu0 0.0
    %263 = vmatpush1.msra.mxu0 0.0
    %264 = vmatprep.subr.mxu0 0.0
    %265 = vmatpush1.msra.mxu0 0.0
    %266 = vmatprep.subr.mxu0 0.0
    %267 = vmatpush1.msra.mxu0 0.0
    %268 = vmatprep.subr.mxu0 0.0
    %269 = vmatpush1.msra.mxu0 0.0
    %270 = vmatprep.subr.mxu0 0.0
    %271 = vmatpush1.msra.mxu0 0.0
    %272 = vmatprep.subr.mxu0 0.0
    %273 = vmatpush1.msra.mxu0 0.0
    %274 = vmatprep.subr.mxu0 0.0
    %275 = vmatpush1.msra.mxu0 0.0
    %276 = vmatprep.subr.mxu0 0.0
    %277 = vmatpush1.msra.mxu0 0.0
    %278 = vmatprep.subr.mxu0 0.0
    %279 = vmatpush1.msra.mxu0 0.0
    %280 = vmatprep.subr.mxu0 0.0
    %281 = vmatpush1.msra.mxu0 0.0
    %282 = vmatprep.subr.mxu0 0.0
    %283 = vmatpush1.msra.mxu0 0.0
    %284 = vmatprep.subr.mxu0 0.0
    %285 = vmatpush1.msra.mxu0 0.0
    %286 = vmatprep.subr.mxu0 0.0
    %287 = vmatpush1.msra.mxu0 0.0
    %288 = vmatprep.subr.mxu0 0.0
    %289 = vmatpush1.msra.mxu0 0.0
    %290 = vmatprep.subr.mxu0 0.0
    %291 = vmatpush1.msra.mxu0 0.0
    %292 = vmatprep.subr.mxu0 0.0
    %293 = vmatpush1.msra.mxu0 0.0
    %294 = vmatprep.subr.mxu0 0.0
    %295 = vmatpush1.msra.mxu0 0.0
    %296 = vmatprep.subr.mxu0 0.0
    %297 = vmatpush1.msra.mxu0 0.0
    %298 = vmatprep.subr.mxu0 0.0
    %299 = vmatpush1.msra.mxu0 0.0
    %300 = vmatprep.subr.mxu0 0.0
    %301 = vmatpush1.msra.mxu0 0.0
    %302 = vmatprep.subr.mxu0 0.0
    %303 = vmatpush1.msra.mxu0 0.0
    %304 = vmatprep.subr.mxu0 0.0
    %305 = vmatpush1.msra.mxu0 0.0
    %306 = vmatprep.subr.mxu0 0.0
    %307 = vmatpush1.msra.mxu0 0.0
    %308 = vmatprep.subr.mxu0 0.0
    %309 = vmatpush1.msra.mxu0 0.0
    %310 = vmatprep.subr.mxu0 0.0
    %311 = vmatpush1.msra.mxu0 0.0
    %312 = vmatprep.mubr.f32.mxu0 0.0
    %313 = vmatmul.mubr.f32.gmra.mrb[0].mxu0 %v243
    %v314 = vpop.f32.mrb[0].mxu0
    %v315 = vadd.f32 %v240, %v314
    %v316 = vpop.f32.mrb[0].mxu0
    %317 = vdwg.mxu0
    %v319 = vrot.slane %v315, 7
    %v321 = vsub.f32 %v315, %v319
    %v322 = vmul.f32 %v321, 1.442695
    %v323 = vpow.pop %v322
    %v324 = vadd.f32 %v323, 1.0
    %v325 = vrcp.pop %v324
    %v326 = vmul.f32 1.0, %v325
    %vm327 = vcmask 123905
    %328 = vst.msk [vmem:[#allocation2 - $0x1] sm:$0x2] %vm327, %v326
    %v329 = vsub.f32 1.0, %v326
    %330 = vst.msk [vmem:[#allocation2] sm:$0x2] %vm327, %v329
    // Predicated region
    $region30: #{tpu_custom_call.1} parent=1 // pred_check
      _
    $region31: #{tpu_custom_call.1} parent=1 // pred_check_branch
      %332 = sbr.rel (0) target = $region33
    $region32: #{tpu_custom_call.1} parent=1 // pred_region
      %s334 = ssub.s32 32, 32
      %335 = vsyncadd [#allocation3], %s334
      %s337 = sshll.u32 [#allocation2], 4
      %s338 = int_to_ptr.vmem [resolvable:$true] %s337
      %340 = dma.vmem_to_hbm [thread:$0]  %s338, 32, %s7, [#allocation3]
    $region33: #{tpu_custom_call.1} parent=1 // pred_fallthru
      _
    // Predicated region
    $region34: #{tpu_custom_call.1} parent=1 // pred_check
      _
    $region35: #{tpu_custom_call.1} parent=1 // pred_check_branch
      %342 = sbr.rel (0) target = $region37
    $region36: #{tpu_custom_call.1} parent=1 // pred_region
      %343 = dma.done [#allocation3], 32
    $region37: #{tpu_custom_call.1} parent=1 // pred_fallthru
      _
    %344 = vsyncpa [#allocation3], 1

</llo_original>
